<compile_context>
chip_gen: v6e
topology: v6e:2x2x1
jax: 0.10.0
libtpu: 0.0.40
codegen_flags: <defaults>
</compile_context>

<pallas_src>
import functools

import jax
import jax.numpy as jnp
from jax.experimental import pallas as pl
from jax.experimental.pallas import tpu as pltpu

_NEG_BIG = -1e30
_POS_BIG = 1e30


def _round_up(v, m):
    return ((v + m - 1) // m) * m


def _couple_cluster_kernel(tcol_ref, x_ref, trow_ref, sqx_ref,
                           hinge_ref, win_ref, *, margin, n, tm):
    x = x_ref[...]                                        # (n, dp), original dtype
    mask = tcol_ref[...] == trow_ref[...]                 # (tm, n) bool

    # per-anchor class centers: mean over positives (MXU matmul, f32 accumulation)
    mask_mm = mask.astype(x.dtype)                        # exact 0/1 in any float dtype
    counts = jnp.sum(mask.astype(jnp.float32), axis=1, keepdims=True)      # (tm, 1)
    inv_counts = pl.reciprocal(jnp.maximum(counts, 1.0))                   # exact 1/c
    centers = jnp.dot(mask_mm, x, preferred_element_type=jnp.float32) * inv_counts

    # dist'[i,j] = |x_j|^2 - 2 c_i.x_j   (the |c_i|^2 row-constant is dropped: it
    # cancels in both the hinge and the dist_cn > dist_cp comparison)
    cross = jax.lax.dot_general(centers.astype(x.dtype), x,
                                (((1,), (1,)), ((), ())),
                                preferred_element_type=jnp.float32)        # (tm, n)
    dist = sqx_ref[...] - 2.0 * cross                                      # (tm, n)

    dist_cp = jnp.max(jnp.where(mask, dist, _NEG_BIG), axis=1, keepdims=True)  # (tm,1)
    dist_cn = jnp.min(jnp.where(mask, _POS_BIG, dist), axis=1, keepdims=True)  # (tm,1)
    # NOTE: an anchor whose class covers every sample has no negatives; here it
    # contributes hinge=0 / win=1 (the PyTorch loop is undefined for that case).

    hinge = jnp.maximum(dist_cp - dist_cn + margin, 0.0)                   # (tm, 1)
    win = (dist_cn > dist_cp).astype(jnp.float32)                          # (tm, 1)

    # zero out padded anchor rows of the last tile
    row = pl.program_id(0) * tm + jax.lax.broadcasted_iota(jnp.int32, (tm, 1), 0)
    valid = row < n
    hinge = jnp.where(valid, hinge, 0.0)
    win = jnp.where(valid, win, 0.0)

    # lane-dense per-tile partials: the tile scalar replicated over an (8,128) block
    hinge_ref[...] = jnp.broadcast_to(jnp.sum(hinge, axis=0, keepdims=True), (8, 128))
    win_ref[...] = jnp.broadcast_to(jnp.sum(win, axis=0, keepdims=True), (8, 128))


def couple_cluster_loss(inputs, targets, margin=0.0):
    n, d = inputs.shape
    dp = _round_up(d, 128)
    x = inputs if dp == d else jnp.pad(inputs, ((0, 0), (0, dp - d)))

    tm = min(256, _round_up(n, 8))            # anchors per grid step
    n_pad = _round_up(n, tm)
    num_tiles = n_pad // tm

    t = targets.astype(jnp.int32)
    t_col = jnp.pad(t, (0, n_pad - n), constant_values=-1).reshape(n_pad, 1)
    t_row = t.reshape(1, n)

    xf = inputs.astype(jnp.float32)
    sq_x = jnp.sum(xf * xf, axis=1).reshape(1, n)          # |x_j|^2 as a lane row

    kernel = functools.partial(_couple_cluster_kernel,
                               margin=float(margin), n=n, tm=tm)
    hinge_p, win_p = pl.pallas_call(
        kernel,
        out_shape=(jax.ShapeDtypeStruct((num_tiles * 8, 128), jnp.float32),
                   jax.ShapeDtypeStruct((num_tiles * 8, 128), jnp.float32)),
        grid=(num_tiles,),
        in_specs=[
            pl.BlockSpec((tm, 1), lambda i: (i, 0)),       # anchor labels (tiled)
            pl.BlockSpec((n, dp), lambda i: (0, 0)),       # all features, resident
            pl.BlockSpec((1, n), lambda i: (0, 0)),        # all labels (row), resident
            pl.BlockSpec((1, n), lambda i: (0, 0)),        # |x_j|^2 row, resident
        ],
        out_specs=(pl.BlockSpec((8, 128), lambda i: (i, 0)),
                   pl.BlockSpec((8, 128), lambda i: (i, 0))),
        compiler_params=pltpu.CompilerParams(
            dimension_semantics=("parallel",),
            vmem_limit_bytes=32 * 1024 * 1024),
    )(t_col, x, t_row, sq_x)

    # each tile scalar was replicated over 8*128 lanes
    inv = 1.0 / (8.0 * 128.0 * n)
    loss = jnp.sum(hinge_p) * inv
    prec = jnp.sum(win_p) * inv
    return loss, prec


def _reference(inputs, targets, margin=0.0):
    # pure-JAX reference mirroring the PyTorch loop (sanity check)
    n = inputs.shape[0]
    mask = targets[:, None] == targets[None, :]
    cps, cns = [], []
    for i in range(n):
        x_p = inputs[mask[i]]
        x_n = inputs[~mask[i]]
        center = jnp.mean(x_p, axis=0)
        cps.append(jnp.max(jnp.sum((x_p - center) ** 2, axis=1)))
        cns.append(jnp.min(jnp.sum((x_n - center) ** 2, axis=1)))
    dist_cp = jnp.stack(cps)
    dist_cn = jnp.stack(cns)
    loss = jnp.mean(jnp.maximum(dist_cp - dist_cn + margin, 0.0))
    prec = jnp.mean((dist_cn > dist_cp).astype(jnp.float32))
    return loss, prec


if __name__ == "__main__":
    key = jax.random.PRNGKey(0)
    n, d = 8, 32
    inputs = jax.random.normal(key, (n, d), dtype=jnp.float32)
    targets = jnp.array([0, 0, 1, 1, 2, 2, 3, 3], dtype=jnp.int32)

    loss, prec = couple_cluster_loss(inputs, targets, margin=0.0)
    jax.block_until_ready((loss, prec))

    ref_loss, ref_prec = _reference(inputs, targets, margin=0.0)
    assert jnp.allclose(loss, ref_loss, rtol=1e-4, atol=1e-4), (loss, ref_loss)
    assert jnp.allclose(prec, ref_prec, rtol=1e-6, atol=1e-6), (prec, ref_prec)

    print("KERNEL_OK")
</pallas_src>

<mosaic_0001>
module attributes {stable_mosaic.version = 11 : i64} {
  func.func @_couple_cluster_kernel(%arg0: i32, %arg1: memref<8x1xi32, #tpu.memory_space<vmem>>, %arg2: memref<8x128xf32, #tpu.memory_space<vmem>>, %arg3: memref<1x8xi32, #tpu.memory_space<vmem>>, %arg4: memref<1x8xf32, #tpu.memory_space<vmem>>, %arg5: memref<8x128xf32, #tpu.memory_space<vmem>>, %arg6: memref<8x128xf32, #tpu.memory_space<vmem>>) attributes {dimension_semantics = [#tpu.dimension_semantics<parallel>], iteration_bounds = array<i64: 1>, scalar_prefetch = 0 : i64, scratch_operands = 0 : i64, tpu.core_type = #tpu.core_type<tc>, window_params = [{transform_indices = @transform_0, window_bounds = array<i64: 8, 1>}, {pipeline_mode = #tpu.pipeline_mode<synchronous>, transform_indices = @transform_1, window_bounds = array<i64: 8, 128>}, {pipeline_mode = #tpu.pipeline_mode<synchronous>, transform_indices = @transform_2, window_bounds = array<i64: 1, 8>}, {pipeline_mode = #tpu.pipeline_mode<synchronous>, transform_indices = @transform_3, window_bounds = array<i64: 1, 8>}, {transform_indices = @transform_4, window_bounds = array<i64: 8, 128>}, {transform_indices = @transform_5, window_bounds = array<i64: 8, 128>}]} {
    %c0 = arith.constant 0 : index
    %c0_0 = arith.constant 0 : index
    %0 = vector.load %arg2[%c0, %c0_0] : memref<8x128xf32, #tpu.memory_space<vmem>>, vector<8x128xf32>
    %c0_1 = arith.constant 0 : index
    %c0_2 = arith.constant 0 : index
    %1 = vector.load %arg1[%c0_1, %c0_2] : memref<8x1xi32, #tpu.memory_space<vmem>>, vector<8x1xi32>
    %c0_3 = arith.constant 0 : index
    %c0_4 = arith.constant 0 : index
    %2 = vector.load %arg3[%c0_3, %c0_4] : memref<1x8xi32, #tpu.memory_space<vmem>>, vector<1x8xi32>
    %3 = vector.broadcast %1 : vector<8x1xi32> to vector<8x8xi32>
    %4 = vector.broadcast %2 : vector<1x8xi32> to vector<8x8xi32>
    %5 = arith.cmpi eq, %3, %4 : vector<8x8xi32>
    %6 = arith.extui %5 : vector<8x8xi1> to vector<8x8xi32>
    %7 = arith.sitofp %6 : vector<8x8xi32> to vector<8x8xf32>
    %8 = arith.extui %5 : vector<8x8xi1> to vector<8x8xi32>
    %9 = arith.sitofp %8 : vector<8x8xi32> to vector<8x8xf32>
    %cst = arith.constant dense<0.000000e+00> : vector<8xf32>
    %10 = vector.multi_reduction <add>, %9, %cst [1] : vector<8x8xf32> to vector<8xf32>
    %11 = vector.shape_cast %10 : vector<8xf32> to vector<8x1xf32>
    %cst_5 = arith.constant 1.000000e+00 : f32
    %12 = vector.broadcast %cst_5 : f32 to vector<8x1xf32>
    %13 = arith.maximumf %11, %12 : vector<8x1xf32>
    %14 = tpu.reciprocal %13 : vector<8x1xf32> -> vector<8x1xf32>
    %cst_6 = arith.constant dense<0.000000e+00> : vector<8x128xf32>
    %15 = tpu.matmul %7, %0, %cst_6 {dimension_numbers = #tpu.dot_dimension_numbers<[1], [0], [0], [1], [0, 0, 1, 1], [], []>} : vector<8x8xf32>, vector<8x128xf32>, vector<8x128xf32> -> vector<8x128xf32>
    %16 = vector.broadcast %14 : vector<8x1xf32> to vector<8x128xf32>
    %17 = arith.mulf %15, %16 : vector<8x128xf32>
    %cst_7 = arith.constant dense<0.000000e+00> : vector<8x8xf32>
    %18 = tpu.matmul %17, %0, %cst_7 {dimension_numbers = #tpu.dot_dimension_numbers<[1], [1], [0], [0], [0, 0, 1, 0], [], []>} : vector<8x128xf32>, vector<8x128xf32>, vector<8x8xf32> -> vector<8x8xf32>
    %c0_8 = arith.constant 0 : index
    %c0_9 = arith.constant 0 : index
    %19 = vector.load %arg4[%c0_8, %c0_9] : memref<1x8xf32, #tpu.memory_space<vmem>>, vector<1x8xf32>
    %cst_10 = arith.constant 2.000000e+00 : f32
    %20 = vector.broadcast %cst_10 : f32 to vector<8x8xf32>
    %21 = arith.mulf %20, %18 : vector<8x8xf32>
    %22 = vector.broadcast %19 : vector<1x8xf32> to vector<8x8xf32>
    %23 = arith.subf %22, %21 : vector<8x8xf32>
    %cst_11 = arith.constant -1.000000e+30 : f32
    %24 = vector.broadcast %cst_11 : f32 to vector<8x8xf32>
    %25 = arith.select %5, %23, %24 : vector<8x8xi1>, vector<8x8xf32>
    %cst_12 = arith.constant dense<0xFF800000> : vector<8xf32>
    %26 = vector.multi_reduction <maximumf>, %25, %cst_12 [1] : vector<8x8xf32> to vector<8xf32>
    %27 = vector.shape_cast %26 : vector<8xf32> to vector<8x1xf32>
    %cst_13 = arith.constant 1.000000e+30 : f32
    %28 = vector.broadcast %cst_13 : f32 to vector<8x8xf32>
    %29 = arith.select %5, %28, %23 : vector<8x8xi1>, vector<8x8xf32>
    %cst_14 = arith.constant dense<0x7F800000> : vector<8xf32>
    %30 = vector.multi_reduction <minimumf>, %29, %cst_14 [1] : vector<8x8xf32> to vector<8xf32>
    %31 = vector.shape_cast %30 : vector<8xf32> to vector<8x1xf32>
    %32 = arith.subf %27, %31 : vector<8x1xf32>
    %cst_15 = arith.constant 0.000000e+00 : f32
    %33 = vector.broadcast %cst_15 : f32 to vector<8x1xf32>
    %34 = arith.addf %32, %33 : vector<8x1xf32>
    %cst_16 = arith.constant 0.000000e+00 : f32
    %35 = vector.broadcast %cst_16 : f32 to vector<8x1xf32>
    %36 = arith.maximumf %34, %35 : vector<8x1xf32>
    %37 = arith.cmpf ogt, %31, %27 : vector<8x1xf32>
    %38 = arith.extui %37 : vector<8x1xi1> to vector<8x1xi32>
    %39 = arith.sitofp %38 : vector<8x1xi32> to vector<8x1xf32>
    %c8_i32 = arith.constant 8 : i32
    %40 = arith.muli %arg0, %c8_i32 : i32
    %41 = tpu.iota {dimensions = array<i32: 0>} : vector<8x1xi32>
    %42 = vector.broadcast %40 : i32 to vector<8x1xi32>
    %43 = arith.addi %42, %41 : vector<8x1xi32>
    %c8_i32_17 = arith.constant 8 : i32
    %44 = vector.broadcast %c8_i32_17 : i32 to vector<8x1xi32>
    %45 = arith.cmpi slt, %43, %44 : vector<8x1xi32>
    %cst_18 = arith.constant 0.000000e+00 : f32
    %46 = vector.broadcast %cst_18 : f32 to vector<8x1xf32>
    %47 = arith.select %45, %36, %46 : vector<8x1xi1>, vector<8x1xf32>
    %cst_19 = arith.constant 0.000000e+00 : f32
    %48 = vector.broadcast %cst_19 : f32 to vector<8x1xf32>
    %49 = arith.select %45, %39, %48 : vector<8x1xi1>, vector<8x1xf32>
    %cst_20 = arith.constant dense<0.000000e+00> : vector<1xf32>
    %50 = vector.multi_reduction <add>, %47, %cst_20 [0] : vector<8x1xf32> to vector<1xf32>
    %51 = vector.shape_cast %50 : vector<1xf32> to vector<1x1xf32>
    %52 = vector.shape_cast %51 : vector<1x1xf32> to vector<1x1xf32>
    %53 = vector.broadcast %52 : vector<1x1xf32> to vector<8x128xf32>
    %c0_21 = arith.constant 0 : index
    %c0_22 = arith.constant 0 : index
    %54 = vector.load %arg5[%c0_21, %c0_22] : memref<8x128xf32, #tpu.memory_space<vmem>>, vector<8x128xf32>
    tpu.vector_store %arg5[%c0_21, %c0_22], %53 {strides = array<i32>} : memref<8x128xf32, #tpu.memory_space<vmem>>, vector<8x128xf32>,
    %cst_23 = arith.constant dense<0.000000e+00> : vector<1xf32>
    %55 = vector.multi_reduction <add>, %49, %cst_23 [0] : vector<8x1xf32> to vector<1xf32>
    %56 = vector.shape_cast %55 : vector<1xf32> to vector<1x1xf32>
    %57 = vector.shape_cast %56 : vector<1x1xf32> to vector<1x1xf32>
    %58 = vector.broadcast %57 : vector<1x1xf32> to vector<8x128xf32>
    %c0_24 = arith.constant 0 : index
    %c0_25 = arith.constant 0 : index
    %59 = vector.load %arg6[%c0_24, %c0_25] : memref<8x128xf32, #tpu.memory_space<vmem>>, vector<8x128xf32>
    tpu.vector_store %arg6[%c0_24, %c0_25], %58 {strides = array<i32>} : memref<8x128xf32, #tpu.memory_space<vmem>>, vector<8x128xf32>,
    return
  }
  func.func @transform_0(%arg0: i32) -> (i32, i32) {
    %c0_i32 = arith.constant 0 : i32
    %c0_i32_0 = arith.constant 0 : i32
    return %arg0, %c0_i32 : i32, i32
  }
  func.func @transform_1(%arg0: i32) -> (i32, i32) {
    %c0_i32 = arith.constant 0 : i32
    %c0_i32_0 = arith.constant 0 : i32
    %c0_i32_1 = arith.constant 0 : i32
    return %c0_i32, %c0_i32_0 : i32, i32
  }
  func.func @transform_2(%arg0: i32) -> (i32, i32) {
    %c0_i32 = arith.constant 0 : i32
    %c0_i32_0 = arith.constant 0 : i32
    %c0_i32_1 = arith.constant 0 : i32
    return %c0_i32, %c0_i32_0 : i32, i32
  }
  func.func @transform_3(%arg0: i32) -> (i32, i32) {
    %c0_i32 = arith.constant 0 : i32
    %c0_i32_0 = arith.constant 0 : i32
    %c0_i32_1 = arith.constant 0 : i32
    return %c0_i32, %c0_i32_0 : i32, i32
  }
  func.func @transform_4(%arg0: i32) -> (i32, i32) {
    %c0_i32 = arith.constant 0 : i32
    %c0_i32_0 = arith.constant 0 : i32
    return %arg0, %c0_i32 : i32, i32
  }
  func.func @transform_5(%arg0: i32) -> (i32, i32) {
    %c0_i32 = arith.constant 0 : i32
    %c0_i32_0 = arith.constant 0 : i32
    return %arg0, %c0_i32 : i32, i32
  }
}

</mosaic_0001>

<llo_original>
// kernel: tpu_custom_call.1
$region0: #{tpu_custom_call.1}
  #allocation0 [shape = 'u32[]', space=smem, size = 0x4, offset = 0x4, fixed_abs, tag = 'smem constant byte address 0x4 - core index']
  #allocation1 [shape = 'u32[144,128]{1,0:T(1,128)}', space=vmem, size = 0x12000, scoped, tag = 'internal scratch']
  %s0 = inlined_call_operand.vmem [shape: s32[8,1], index: 0, kind: input, shape index: {}]
  %s1 = inlined_call_operand.vmem [shape: f32[8,128], index: 1, kind: input, shape index: {}]
  %s2 = inlined_call_operand.vmem [shape: s32[1,8], index: 2, kind: input, shape index: {}]
  %s3 = inlined_call_operand.vmem [shape: f32[1,8], index: 3, kind: input, shape index: {}]
  %s4 = inlined_call_operand.hbm [shape: f32[8,128], index: 4, kind: output, shape index: {0}]
  %s5 = inlined_call_operand.hbm [shape: f32[8,128], index: 5, kind: output, shape index: {1}]
  %6 = xla_tuple %s4, %s5
  %s7 = sld [smem:[#allocation0]]
  $region34: #{tpu_custom_call.1} parent=0
    _
  %s9 = ssub.s32 1, %s7
  %s10 = scalar_select 0, %s9, %s7
  $region1: #{tpu_custom_call.1} parent=0
    #allocation2 [shape = 'u8[4096]{0}', space=vmem, size = 0x1000, scoped, tag = 'output window, operand 0, single buffered']
    #allocation3 [shape = 's32[1]{0}', space=sflag, size = 0x4, scoped, tag = 'scoped memory for tpu_custom_call.1']
    #allocation4 [shape = 'u8[4096]{0}', space=vmem, size = 0x1000, scoped, tag = 'output window, operand 1, single buffered']
    #allocation5 [shape = 's32[1]{0}', space=sflag, size = 0x4, scoped, tag = 'scoped memory for tpu_custom_call.1']
    %11 = vsyncpa [#allocation3], 0
    %12 = vsyncpa [#allocation5], 0
    // Predicated region
    $region2: #{tpu_custom_call.1} parent=1 // pred_check
      _
    $region3: #{tpu_custom_call.1} parent=1 // pred_check_branch
      %14 = sbr.rel (0) target = $region5
    $region4: #{tpu_custom_call.1} parent=1 // pred_region
      _
    $region5: #{tpu_custom_call.1} parent=1 // pred_fallthru
      _
    // Predicated region
    $region6: #{tpu_custom_call.1} parent=1 // pred_check
      _
    $region7: #{tpu_custom_call.1} parent=1 // pred_check_branch
      %16 = sbr.rel (0) target = $region9
    $region8: #{tpu_custom_call.1} parent=1 // pred_region
      _
    $region9: #{tpu_custom_call.1} parent=1 // pred_fallthru
      _
    // Predicated region
    $region10: #{tpu_custom_call.1} parent=1 // pred_check
      _
    $region11: #{tpu_custom_call.1} parent=1 // pred_check_branch
      %18 = sbr.rel (0) target = $region13
    $region12: #{tpu_custom_call.1} parent=1 // pred_region
      _
    $region13: #{tpu_custom_call.1} parent=1 // pred_fallthru
      _
    // Predicated region
    $region14: #{tpu_custom_call.1} parent=1 // pred_check
      _
    $region15: #{tpu_custom_call.1} parent=1 // pred_check_branch
      %20 = sbr.rel (0) target = $region17
    $region16: #{tpu_custom_call.1} parent=1 // pred_region
      _
    $region17: #{tpu_custom_call.1} parent=1 // pred_fallthru
      _
    %v21 = vld [vmem:[%s1] sm:$0xff]
    %v22 = vld [vmem:[%s0] sm:$0xff]
    %v23 = vld [vmem:[%s2] sm:$0x1]
    %24 = vset.pattern.permute.xlu0 0
    %25 = vperm.xlu0 %24, %v22
    %v26 = vpop.permute.xlu0 %25
    %v27 = vlaneseq
    %v28 = vshrl.u32 %v27, 7
    %v29 = vsub.s32 0, %v28
    %v30 = vrot.slane %v23, %v29
    %vm31 = vcmp.eq.s32.totalorder %v26, %v30
    %v32 = vsel %vm31, 1, 0
    %v33 = vcvt.s32.f32 %v32
    %vm34 = vcmask 64512
    %v35 = vsel %vm34, %v33, 0.0
    %36 = vadd.xlane.f32.xlu0 %v35
    %v37 = vpop.xlane.xlu0 %36
    %v38 = vmax.f32 %v37, 1.0
    %v39 = vrcp.pop %v38
    %v41 = vsel %vm34, %v33, 0
    %43 = vmatprep.subr.mxu0 0.0
    %44 = vmatpush1.msra.mxu0 0.0
    %45 = vmatprep.subr.mxu0 0.0
    %46 = vmatpush1.msra.mxu0 0.0
    %47 = vmatprep.subr.mxu0 0.0
    %48 = vmatpush1.msra.mxu0 0.0
    %49 = vmatprep.subr.mxu0 0.0
    %50 = vmatpush1.msra.mxu0 0.0
    %51 = vmatprep.subr.mxu0 0.0
    %52 = vmatpush1.msra.mxu0 0.0
    %53 = vmatprep.subr.mxu0 0.0
    %54 = vmatpush1.msra.mxu0 0.0
    %55 = vmatprep.subr.mxu0 0.0
    %56 = vmatpush1.msra.mxu0 0.0
    %57 = vmatprep.subr.mxu0 0.0
    %58 = vmatpush1.msra.mxu0 0.0
    %59 = vmatprep.subr.mxu0 0.0
    %60 = vmatpush1.msra.mxu0 0.0
    %61 = vmatprep.subr.mxu0 0.0
    %62 = vmatpush1.msra.mxu0 0.0
    %63 = vmatprep.subr.mxu0 0.0
    %64 = vmatpush1.msra.mxu0 0.0
    %65 = vmatprep.subr.mxu0 0.0
    %66 = vmatpush1.msra.mxu0 0.0
    %67 = vmatprep.subr.mxu0 0.0
    %68 = vmatpush1.msra.mxu0 0.0
    %69 = vmatprep.subr.mxu0 0.0
    %70 = vmatpush1.msra.mxu0 0.0
    %71 = vmatprep.subr.mxu0 0.0
    %72 = vmatpush1.msra.mxu0 0.0
    %73 = vmatprep.subr.mxu0 0.0
    %74 = vmatpush1.msra.mxu0 %v21
    %75 = vmatprep.subr.mxu0 0.0
    %76 = vmatpush2.msra.mxu0 0.0
    %77 = vmatprep.subr.mxu0 0.0
    %78 = vmatpush2.msra.mxu0 0.0
    %79 = vmatprep.subr.mxu0 0.0
    %80 = vmatpush2.msra.mxu0 0.0
    %81 = vmatprep.subr.mxu0 0.0
    %82 = vmatpush2.msra.mxu0 0.0
    %83 = vmatprep.subr.mxu0 0.0
    %84 = vmatpush2.msra.mxu0 0.0
    %85 = vmatprep.subr.mxu0 0.0
    %86 = vmatpush2.msra.mxu0 0.0
    %87 = vmatprep.subr.mxu0 0.0
    %88 = vmatpush2.msra.mxu0 0.0
    %89 = vmatprep.subr.mxu0 0.0
    %90 = vmatpush2.msra.mxu0 0.0
    %91 = vmatprep.subr.mxu0 0.0
    %92 = vmatpush2.msra.mxu0 0.0
    %93 = vmatprep.subr.mxu0 0.0
    %94 = vmatpush2.msra.mxu0 0.0
    %95 = vmatprep.subr.mxu0 0.0
    %96 = vmatpush2.msra.mxu0 0.0
    %97 = vmatprep.subr.mxu0 0.0
    %98 = vmatpush2.msra.mxu0 0.0
    %99 = vmatprep.subr.mxu0 0.0
    %100 = vmatpush2.msra.mxu0 0.0
    %101 = vmatprep.subr.mxu0 0.0
    %102 = vmatpush2.msra.mxu0 0.0
    %103 = vmatprep.subr.mxu0 0.0
    %104 = vmatpush2.msra.mxu0 0.0
    %105 = vmatprep.subr.mxu0 0.0
    %106 = vmatpush2.msra.mxu0 0.0
    %107 = vmatprep.mubr.f32.mxu0 0.0
    %108 = vmatmul.mubr.f32.gmra.mxu0 %v41
    %v109 = vpop.f32.mrf.mxu0
    %v110 = vadd.f32 0.0, %v109
    %v111 = vpop.f32.mrf.mxu0
    %112 = vdwg.mxu0
    %v113 = vmul.f32 %v110, %v39
    %114 = vmatprep.subr.mxu0 0.0
    %115 = vmatpush1.xpose.msra.mxu0 0.0
    %116 = vmatprep.subr.mxu0 0.0
    %117 = vmatpush1.xpose.msra.mxu0 0.0
    %118 = vmatprep.subr.mxu0 0.0
    %119 = vmatpush1.xpose.msra.mxu0 0.0
    %120 = vmatprep.subr.mxu0 0.0
    %121 = vmatpush1.xpose.msra.mxu0 0.0
    %122 = vmatprep.subr.mxu0 0.0
    %123 = vmatpush1.xpose.msra.mxu0 0.0
    %124 = vmatprep.subr.mxu0 0.0
    %125 = vmatpush1.xpose.msra.mxu0 0.0
    %126 = vmatprep.subr.mxu0 0.0
    %127 = vmatpush1.xpose.msra.mxu0 0.0
    %128 = vmatprep.subr.mxu0 0.0
    %129 = vmatpush1.xpose.msra.mxu0 0.0
    %130 = vmatprep.subr.mxu0 0.0
    %131 = vmatpush1.xpose.msra.mxu0 0.0
    %132 = vmatprep.subr.mxu0 0.0
    %133 = vmatpush1.xpose.msra.mxu0 0.0
    %134 = vmatprep.subr.mxu0 0.0
    %135 = vmatpush1.xpose.msra.mxu0 0.0
    %136 = vmatprep.subr.mxu0 0.0
    %137 = vmatpush1.xpose.msra.mxu0 0.0
    %138 = vmatprep.subr.mxu0 0.0
    %139 = vmatpush1.xpose.msra.mxu0 0.0
    %140 = vmatprep.subr.mxu0 0.0
    %141 = vmatpush1.xpose.msra.mxu0 0.0
    %142 = vmatprep.subr.mxu0 0.0
    %143 = vmatpush1.xpose.msra.mxu0 0.0
    %144 = vmatprep.subr.mxu0 0.0
    %145 = vmatpush1.xpose.msra.mxu0 %v21
    %146 = vmatprep.subr.mxu0 0.0
    %147 = vmatpush2.xpose.msra.mxu0 0.0
    %148 = vmatprep.subr.mxu0 0.0
    %149 = vmatpush2.xpose.msra.mxu0 0.0
    %150 = vmatprep.subr.mxu0 0.0
    %151 = vmatpush2.xpose.msra.mxu0 0.0
    %152 = vmatprep.subr.mxu0 0.0
    %153 = vmatpush2.xpose.msra.mxu0 0.0
    %154 = vmatprep.subr.mxu0 0.0
    %155 = vmatpush2.xpose.msra.mxu0 0.0
    %156 = vmatprep.subr.mxu0 0.0
    %157 = vmatpush2.xpose.msra.mxu0 0.0
    %158 = vmatprep.subr.mxu0 0.0
    %159 = vmatpush2.xpose.msra.mxu0 0.0
    %160 = vmatprep.subr.mxu0 0.0
    %161 = vmatpush2.xpose.msra.mxu0 0.0
    %162 = vmatprep.subr.mxu0 0.0
    %163 = vmatpush2.xpose.msra.mxu0 0.0
    %164 = vmatprep.subr.mxu0 0.0
    %165 = vmatpush2.xpose.msra.mxu0 0.0
    %166 = vmatprep.subr.mxu0 0.0
    %167 = vmatpush2.xpose.msra.mxu0 0.0
    %168 = vmatprep.subr.mxu0 0.0
    %169 = vmatpush2.xpose.msra.mxu0 0.0
    %170 = vmatprep.subr.mxu0 0.0
    %171 = vmatpush2.xpose.msra.mxu0 0.0
    %172 = vmatprep.subr.mxu0 0.0
    %173 = vmatpush2.xpose.msra.mxu0 0.0
    %174 = vmatprep.subr.mxu0 0.0
    %175 = vmatpush2.xpose.msra.mxu0 0.0
    %176 = vmatprep.subr.mxu0 0.0
    %177 = vmatpush2.xpose.msra.mxu0 0.0
    %178 = vmatprep.mubr.f32.mxu0 0.0
    %179 = vmatmul.mubr.f32.gmra.mxu0 %v113
    %v180 = vpop.f32.mrf.mxu0
    %v181 = vadd.f32 0.0, %v180
    %v182 = vpop.f32.mrf.mxu0
    %183 = vdwg.mxu0
    %v184 = vld [vmem:[%s3] sm:$0x1]
    %v185 = vmul.f32 %v181, 2.0
    %v187 = vlaneseq
    %v188 = vshrl.u32 %v187, 7
    %v189 = vsub.s32 0, %v188
    %v190 = vrot.slane %v184, %v189
    %v192 = vsub.f32 %v190, %v185
    %v193 = vsel %vm31, %v192, -1e+30
    %v194 = vsel %vm34, %v193, -inf
    %195 = vmax.xlane.f32.xlu0 %v194
    %v196 = vpop.xlane.xlu0 %195
    %v197 = vsel %vm31, 1e+30, %v192
    %v198 = vsel %vm34, %v197, inf
    %199 = vmin.xlane.f32.xlu0 %v198
    %v200 = vpop.xlane.xlu0 %199
    %v201 = vsub.f32 %v196, %v200
    %v202 = vadd.f32 %v201, 0.0
    %v203 = vmax.f32 %v202, 0.0
    %vm204 = vcmp.gt.f32.partialorder %v200, %v196
    %v205 = vsel %vm204, 1, 0
    %v206 = vcvt.s32.f32 %v205
    %s207 = smul.u32 0, 8
    %v208 = vlaneseq
    %v209 = vshrl.u32 %v208, 7
    %v210 = vstv %s207
    %v211 = vadd.s32 %v210, %v209
    %vm212 = vcmp.lt.s32.totalorder %v211, 8
    %v213 = vsel %vm212, %v203, 0.0
    %v214 = vsel %vm212, %v206, 0.0
    %v215 = vrot.slane %v213, 4
    %v216 = vadd.f32 %v213, %v215
    %v217 = vrot.slane %v216, 2
    %v218 = vadd.f32 %v216, %v217
    %v219 = vrot.slane %v218, 1
    %v220 = vadd.f32 %v218, %v219
    %221 = vst [vmem:[#allocation2] sm:$0xff] %v220
    %v222 = vrot.slane %v214, 4
    %v223 = vadd.f32 %v214, %v222
    %v224 = vrot.slane %v223, 2
    %v225 = vadd.f32 %v223, %v224
    %v226 = vrot.slane %v225, 1
    %v227 = vadd.f32 %v225, %v226
    %228 = vst [vmem:[#allocation4] sm:$0xff] %v227
    // Predicated region
    $region18: #{tpu_custom_call.1} parent=1 // pred_check
      _
    $region19: #{tpu_custom_call.1} parent=1 // pred_check_branch
      %230 = sbr.rel (0) target = $region21
    $region20: #{tpu_custom_call.1} parent=1 // pred_region
      %s232 = ssub.s32 128, 128
      %233 = vsyncadd [#allocation3], %s232
      %s235 = sshll.u32 [#allocation2], 4
      %s236 = int_to_ptr.vmem [resolvable:$true] %s235
      %238 = dma.vmem_to_hbm [thread:$0]  %s236, 128, %s4, [#allocation3]
    $region21: #{tpu_custom_call.1} parent=1 // pred_fallthru
      _
    // Predicated region
    $region22: #{tpu_custom_call.1} parent=1 // pred_check
      _
    $region23: #{tpu_custom_call.1} parent=1 // pred_check_branch
      %240 = sbr.rel (0) target = $region25
    $region24: #{tpu_custom_call.1} parent=1 // pred_region
      %s242 = ssub.s32 128, 128
      %243 = vsyncadd [#allocation5], %s242
      %s245 = sshll.u32 [#allocation4], 4
      %s246 = int_to_ptr.vmem [resolvable:$true] %s245
      %248 = dma.vmem_to_hbm [thread:$0]  %s246, 128, %s5, [#allocation5]
    $region25: #{tpu_custom_call.1} parent=1 // pred_fallthru
      _
    // Predicated region
    $region26: #{tpu_custom_call.1} parent=1 // pred_check
      _
    $region27: #{tpu_custom_call.1} parent=1 // pred_check_branch
      %250 = sbr.rel (0) target = $region29
    $region28: #{tpu_custom_call.1} parent=1 // pred_region
      %251 = dma.done [#allocation3], 128
    $region29: #{tpu_custom_call.1} parent=1 // pred_fallthru
      _
    // Predicated region
    $region30: #{tpu_custom_call.1} parent=1 // pred_check
      _
    $region31: #{tpu_custom_call.1} parent=1 // pred_check_branch
      %253 = sbr.rel (0) target = $region33
    $region32: #{tpu_custom_call.1} parent=1 // pred_region
      %254 = dma.done [#allocation5], 128
    $region33: #{tpu_custom_call.1} parent=1 // pred_fallthru
      _
    %255 = vsyncpa [#allocation3], 1
    %256 = vsyncpa [#allocation5], 1

</llo_original>
